<compile_context>
chip_gen: v6e
topology: v6e:2x2x1
jax: 0.10.0
libtpu: 0.0.40
codegen_flags: <defaults>
</compile_context>

<pallas_src>
import math

import jax
import jax.numpy as jnp
from jax.experimental import pallas as pl
from jax.experimental.pallas import tpu as pltpu

INPUT_DIM = 1
NEURONS1 = 200
NEURONS2 = 10
OUTPUT_DIM = 1

_MAX_BATCH_TILE = 4096  # lanes per grid step; multiple of 128


def _round_up(n, m):
    return ((n + m - 1) // m) * m


def _mlp_kernel(x_ref, w1_ref, b1_ref, w2t_ref, b2_ref, w3_ref, b3_ref, o_ref):
    # Batch-in-lanes layout: x block is [1, TB] (batch along the 128-lane axis).
    x = x_ref[...]                                              # [1, TB]

    # fc1 + ReLU: contraction dim is 1 -> pure outer product on the VPU.
    # [N1, 1] * [1, TB] + [N1, 1]  ->  [N1, TB]; every vreg fully lane-utilized.
    h1 = jnp.maximum(w1_ref[...] * x + b1_ref[...], 0.0)        # [200, TB]
    # TODO(synk): if fc1 VALU work binds (large TB on v7x), fold mul+bias onto the
    # MXU via the augmented outer product [W1|b1] @ [x;1] (K=2), leaving only ReLU
    # on the VPU.

    # fc2 + ReLU: K = 200 contraction -> MXU, f32 accumulation.
    # [N2, N1] @ [N1, TB] -> [N2, TB]
    h2 = jnp.dot(w2t_ref[...], h1, preferred_element_type=jnp.float32)
    h2 = jnp.maximum(h2 + b2_ref[...], 0.0)                     # [10, TB]

    # out: contraction over N2 = 10 sublanes -> VPU multiply + sublane (XLU) reduce.
    y = jnp.sum(h2 * w3_ref[...], axis=0, keepdims=True) + b3_ref[...]   # [1, TB]
    o_ref[...] = y.astype(o_ref.dtype)


def _choose_tile(b128, max_tile):
    """Largest lane tile (multiple of 128, <= max_tile) keeping padding bounded."""
    if b128 <= max_tile:
        return b128                      # single grid step; pad <= 127 rows total
    tb = max_tile
    while tb >= 1024 and b128 % tb != 0:
        tb //= 2
    if b128 % tb != 0:
        tb = max_tile                    # accept < one tile of extra padding
    return tb


def neural_network_forward(x, params, *, max_block_b=_MAX_BATCH_TILE):
    """Full 3-layer MLP forward pass in a single batch-tiled Pallas kernel.

    x: [B, INPUT_DIM] float32 (PyTorch row convention).
    params: w1 (INPUT_DIM, N1), b1 (1, N1), w2 (N1, N2), b2 (1, N2),
            w3 (N2, OUTPUT_DIM), b3 (1, OUTPUT_DIM)  — y = x @ W + b per layer.
    """
    B = x.shape[0]

    # Column/row forms for the batch-in-lanes layout (cheap reshapes / tiny transpose).
    w1c = params["w1"].reshape(NEURONS1, INPUT_DIM)     # (200, 1)
    b1c = params["b1"].reshape(NEURONS1, 1)             # (200, 1)
    w2t = params["w2"].T                                # (10, 200)
    b2c = params["b2"].reshape(NEURONS2, 1)             # (10, 1)
    w3c = params["w3"].reshape(NEURONS2, OUTPUT_DIM)    # (10, 1)
    b3c = params["b3"].reshape(OUTPUT_DIM, 1)           # (1, 1)

    # [B, 1] -> [1, B] is layout-free (one dim is size 1).
    x_row = x.reshape(1, B)

    b128 = _round_up(max(B, 1), 128)
    tb = _choose_tile(b128, max_block_b)
    b_pad = _round_up(b128, tb)
    if b_pad != B:
        x_row = jnp.pad(x_row, ((0, 0), (0, b_pad - B)))

    grid = (b_pad // tb,)

    flops = 2 * b_pad * (
        INPUT_DIM * NEURONS1 + NEURONS1 * NEURONS2 + NEURONS2 * OUTPUT_DIM
    )
    param_bytes = 4 * (w1c.size + b1c.size + w2t.size + b2c.size + w3c.size + b3c.size)
    bytes_accessed = 4 * (b_pad * INPUT_DIM + b_pad * OUTPUT_DIM) + param_bytes

    out_row = pl.pallas_call(
        _mlp_kernel,
        out_shape=jax.ShapeDtypeStruct((1, b_pad), jnp.float32),
        grid=grid,
        in_specs=[
            # Batch-tiled input: lane-dense [1, TB] blocks.
            pl.BlockSpec((1, tb), lambda i: (0, i)),
            # Weights/biases: constant block index -> loaded once, resident in VMEM.
            pl.BlockSpec(w1c.shape, lambda i: (0, 0)),
            pl.BlockSpec(b1c.shape, lambda i: (0, 0)),
            pl.BlockSpec(w2t.shape, lambda i: (0, 0)),
            pl.BlockSpec(b2c.shape, lambda i: (0, 0)),
            pl.BlockSpec(w3c.shape, lambda i: (0, 0)),
            pl.BlockSpec(b3c.shape, lambda i: (0, 0)),
        ],
        out_specs=pl.BlockSpec((1, tb), lambda i: (0, i)),
        compiler_params=pltpu.CompilerParams(
            dimension_semantics=("parallel",),
        ),
        cost_estimate=pl.CostEstimate(
            flops=flops, transcendentals=0, bytes_accessed=bytes_accessed
        ),
    )(x_row, w1c, b1c, w2t, b2c, w3c, b3c)

    return out_row[0, :B].reshape(B, OUTPUT_DIM)


def init_params(key):
    """Deterministic init mimicking PyTorch nn.Linear default (uniform +/- 1/sqrt(fan_in))."""
    keys = jax.random.split(key, 6)

    def linear(kw, kb, fan_in, fan_out):
        bound = 1.0 / math.sqrt(fan_in)
        w = jax.random.uniform(kw, (fan_in, fan_out), jnp.float32, -bound, bound)
        b = jax.random.uniform(kb, (1, fan_out), jnp.float32, -bound, bound)
        return w, b

    w1, b1 = linear(keys[0], keys[1], INPUT_DIM, NEURONS1)
    w2, b2 = linear(keys[2], keys[3], NEURONS1, NEURONS2)
    w3, b3 = linear(keys[4], keys[5], NEURONS2, OUTPUT_DIM)
    return {"w1": w1, "b1": b1, "w2": w2, "b2": b2, "w3": w3, "b3": b3}


def _reference_forward(x, p):
    h1 = jnp.maximum(x @ p["w1"] + p["b1"], 0.0)
    h2 = jnp.maximum(h1 @ p["w2"] + p["b2"], 0.0)
    return h2 @ p["w3"] + p["b3"]


if __name__ == "__main__":
    key = jax.random.PRNGKey(0)
    k_params, k_x, k_x2 = jax.random.split(key, 3)

    params = init_params(k_params)

    # Primary small-shape check.
    batch = 8
    x = jax.random.normal(k_x, (batch, INPUT_DIM), jnp.float32)
    y = jax.block_until_ready(neural_network_forward(x, params))
    y_ref = _reference_forward(x, params)
    assert y.shape == (batch, OUTPUT_DIM)
    assert jnp.allclose(y, y_ref, atol=1e-5, rtol=1e-5)

    # Ragged-batch check (exercises the lane-padding path).
    x2 = jax.random.normal(k_x2, (5, INPUT_DIM), jnp.float32)
    y2 = jax.block_until_ready(neural_network_forward(x2, params))
    y2_ref = _reference_forward(x2, params)
    assert y2.shape == (5, OUTPUT_DIM)
    assert jnp.allclose(y2, y2_ref, atol=1e-5, rtol=1e-5)

    print("KERNEL_OK")
</pallas_src>

<mosaic_0001>
module attributes {stable_mosaic.version = 11 : i64} {
  func.func @_mlp_kernel(%arg0: i32, %arg1: memref<1x128xf32, #tpu.memory_space<vmem>>, %arg2: memref<200x1xf32, #tpu.memory_space<vmem>>, %arg3: memref<200x1xf32, #tpu.memory_space<vmem>>, %arg4: memref<10x200xf32, #tpu.memory_space<vmem>>, %arg5: memref<10x1xf32, #tpu.memory_space<vmem>>, %arg6: memref<10x1xf32, #tpu.memory_space<vmem>>, %arg7: memref<1x1xf32, #tpu.memory_space<vmem>>, %arg8: memref<1x128xf32, #tpu.memory_space<vmem>>) attributes {dimension_semantics = [#tpu.dimension_semantics<parallel>], iteration_bounds = array<i64: 1>, scalar_prefetch = 0 : i64, scratch_operands = 0 : i64, tpu.core_type = #tpu.core_type<tc>, window_params = [{transform_indices = @transform_0, window_bounds = array<i64: 1, 128>}, {pipeline_mode = #tpu.pipeline_mode<synchronous>, transform_indices = @transform_1, window_bounds = array<i64: 200, 1>}, {pipeline_mode = #tpu.pipeline_mode<synchronous>, transform_indices = @transform_2, window_bounds = array<i64: 200, 1>}, {pipeline_mode = #tpu.pipeline_mode<synchronous>, transform_indices = @transform_3, window_bounds = array<i64: 10, 200>}, {pipeline_mode = #tpu.pipeline_mode<synchronous>, transform_indices = @transform_4, window_bounds = array<i64: 10, 1>}, {pipeline_mode = #tpu.pipeline_mode<synchronous>, transform_indices = @transform_5, window_bounds = array<i64: 10, 1>}, {pipeline_mode = #tpu.pipeline_mode<synchronous>, transform_indices = @transform_6, window_bounds = array<i64: 1, 1>}, {transform_indices = @transform_7, window_bounds = array<i64: 1, 128>}]} {
    %c0 = arith.constant 0 : index
    %c0_0 = arith.constant 0 : index
    %0 = vector.load %arg1[%c0, %c0_0] : memref<1x128xf32, #tpu.memory_space<vmem>>, vector<1x128xf32>
    %c0_1 = arith.constant 0 : index
    %c0_2 = arith.constant 0 : index
    %1 = vector.load %arg2[%c0_1, %c0_2] : memref<200x1xf32, #tpu.memory_space<vmem>>, vector<200x1xf32>
    %2 = vector.broadcast %1 : vector<200x1xf32> to vector<200x128xf32>
    %3 = vector.broadcast %0 : vector<1x128xf32> to vector<200x128xf32>
    %4 = arith.mulf %2, %3 : vector<200x128xf32>
    %c0_3 = arith.constant 0 : index
    %c0_4 = arith.constant 0 : index
    %5 = vector.load %arg3[%c0_3, %c0_4] : memref<200x1xf32, #tpu.memory_space<vmem>>, vector<200x1xf32>
    %6 = vector.broadcast %5 : vector<200x1xf32> to vector<200x128xf32>
    %7 = arith.addf %4, %6 : vector<200x128xf32>
    %cst = arith.constant 0.000000e+00 : f32
    %8 = vector.broadcast %cst : f32 to vector<200x128xf32>
    %9 = arith.maximumf %7, %8 : vector<200x128xf32>
    %c0_5 = arith.constant 0 : index
    %c0_6 = arith.constant 0 : index
    %10 = vector.load %arg4[%c0_5, %c0_6] : memref<10x200xf32, #tpu.memory_space<vmem>>, vector<10x200xf32>
    %cst_7 = arith.constant dense<0.000000e+00> : vector<10x128xf32>
    %11 = tpu.matmul %10, %9, %cst_7 {dimension_numbers = #tpu.dot_dimension_numbers<[1], [0], [0], [1], [0, 0, 1, 1], [], []>} : vector<10x200xf32>, vector<200x128xf32>, vector<10x128xf32> -> vector<10x128xf32>
    %c0_8 = arith.constant 0 : index
    %c0_9 = arith.constant 0 : index
    %12 = vector.load %arg5[%c0_8, %c0_9] : memref<10x1xf32, #tpu.memory_space<vmem>>, vector<10x1xf32>
    %13 = vector.broadcast %12 : vector<10x1xf32> to vector<10x128xf32>
    %14 = arith.addf %11, %13 : vector<10x128xf32>
    %cst_10 = arith.constant 0.000000e+00 : f32
    %15 = vector.broadcast %cst_10 : f32 to vector<10x128xf32>
    %16 = arith.maximumf %14, %15 : vector<10x128xf32>
    %c0_11 = arith.constant 0 : index
    %c0_12 = arith.constant 0 : index
    %17 = vector.load %arg6[%c0_11, %c0_12] : memref<10x1xf32, #tpu.memory_space<vmem>>, vector<10x1xf32>
    %18 = vector.broadcast %17 : vector<10x1xf32> to vector<10x128xf32>
    %19 = arith.mulf %16, %18 : vector<10x128xf32>
    %cst_13 = arith.constant dense<0.000000e+00> : vector<128xf32>
    %20 = vector.multi_reduction <add>, %19, %cst_13 [0] : vector<10x128xf32> to vector<128xf32>
    %21 = vector.shape_cast %20 : vector<128xf32> to vector<1x128xf32>
    %c0_14 = arith.constant 0 : index
    %c0_15 = arith.constant 0 : index
    %22 = vector.load %arg7[%c0_14, %c0_15] : memref<1x1xf32, #tpu.memory_space<vmem>>, vector<1x1xf32>
    %23 = vector.broadcast %22 : vector<1x1xf32> to vector<1x128xf32>
    %24 = arith.addf %21, %23 : vector<1x128xf32>
    %c0_16 = arith.constant 0 : index
    %c0_17 = arith.constant 0 : index
    %25 = vector.load %arg8[%c0_16, %c0_17] : memref<1x128xf32, #tpu.memory_space<vmem>>, vector<1x128xf32>
    tpu.vector_store %arg8[%c0_16, %c0_17], %24 {strides = array<i32>} : memref<1x128xf32, #tpu.memory_space<vmem>>, vector<1x128xf32>,
    return
  }
  func.func @transform_0(%arg0: i32) -> (i32, i32) {
    %c0_i32 = arith.constant 0 : i32
    %c0_i32_0 = arith.constant 0 : i32
    return %c0_i32, %arg0 : i32, i32
  }
  func.func @transform_1(%arg0: i32) -> (i32, i32) {
    %c0_i32 = arith.constant 0 : i32
    %c0_i32_0 = arith.constant 0 : i32
    %c0_i32_1 = arith.constant 0 : i32
    return %c0_i32, %c0_i32_0 : i32, i32
  }
  func.func @transform_2(%arg0: i32) -> (i32, i32) {
    %c0_i32 = arith.constant 0 : i32
    %c0_i32_0 = arith.constant 0 : i32
    %c0_i32_1 = arith.constant 0 : i32
    return %c0_i32, %c0_i32_0 : i32, i32
  }
  func.func @transform_3(%arg0: i32) -> (i32, i32) {
    %c0_i32 = arith.constant 0 : i32
    %c0_i32_0 = arith.constant 0 : i32
    %c0_i32_1 = arith.constant 0 : i32
    return %c0_i32, %c0_i32_0 : i32, i32
  }
  func.func @transform_4(%arg0: i32) -> (i32, i32) {
    %c0_i32 = arith.constant 0 : i32
    %c0_i32_0 = arith.constant 0 : i32
    %c0_i32_1 = arith.constant 0 : i32
    return %c0_i32, %c0_i32_0 : i32, i32
  }
  func.func @transform_5(%arg0: i32) -> (i32, i32) {
    %c0_i32 = arith.constant 0 : i32
    %c0_i32_0 = arith.constant 0 : i32
    %c0_i32_1 = arith.constant 0 : i32
    return %c0_i32, %c0_i32_0 : i32, i32
  }
  func.func @transform_6(%arg0: i32) -> (i32, i32) {
    %c0_i32 = arith.constant 0 : i32
    %c0_i32_0 = arith.constant 0 : i32
    %c0_i32_1 = arith.constant 0 : i32
    return %c0_i32, %c0_i32_0 : i32, i32
  }
  func.func @transform_7(%arg0: i32) -> (i32, i32) {
    %c0_i32 = arith.constant 0 : i32
    %c0_i32_0 = arith.constant 0 : i32
    return %c0_i32, %arg0 : i32, i32
  }
}

</mosaic_0001>

<llo_original>
// kernel: tpu_custom_call.1
$region0: #{tpu_custom_call.1}
  #allocation0 [shape = 'u32[]', space=smem, size = 0x4, offset = 0x4, fixed_abs, tag = 'smem constant byte address 0x4 - core index']
  #allocation1 [shape = 'u32[144,128]{1,0:T(1,128)}', space=vmem, size = 0x12000, scoped, tag = 'internal scratch']
  #allocation2 [shape = 'f32[1,1]{1,0:T(1,128)S(1)}', space=vmem, size = 0x200, scoped, tag = 'scoped memory for tpu_custom_call.1']
  %s0 = inlined_call_operand.vmem [shape: f32[1,128], index: 0, kind: input, shape index: {}]
  %s1 = inlined_call_operand.vmem [shape: f32[200,1], index: 1, kind: input, shape index: {}]
  %s2 = inlined_call_operand.vmem [shape: f32[200,1], index: 2, kind: input, shape index: {}]
  %s3 = inlined_call_operand.vmem [shape: f32[10,200], index: 3, kind: input, shape index: {}]
  %s4 = inlined_call_operand.vmem [shape: f32[10,1], index: 4, kind: input, shape index: {}]
  %s5 = inlined_call_operand.vmem [shape: f32[10,1], index: 5, kind: input, shape index: {}]
  %s6 = inlined_call_operand.<no memory space> [shape: f32[1,1], index: 6, kind: input, shape index: {}]
  %s7 = inlined_call_operand.hbm [shape: f32[1,128], index: 7, kind: output, shape index: {}]
  %s8 = sld [smem:[#allocation0]]
  $region38: #{tpu_custom_call.1} parent=0
    _
  %s10 = ssub.s32 1, %s8
  %s11 = scalar_select 0, %s10, %s8
  %v12 = vstv %s6
  %13 = vst [vmem:[#allocation2] sm:$0x1] %v12
  $region1: #{tpu_custom_call.1} parent=0
    #allocation3 [shape = 'u8[512]{0}', space=vmem, size = 0x400, scoped, tag = 'output window, operand 0, single buffered']
    #allocation4 [shape = 's32[1]{0}', space=sflag, size = 0x4, scoped, tag = 'scoped memory for tpu_custom_call.1']
    %14 = vsyncpa [#allocation4], 0
    // Predicated region
    $region2: #{tpu_custom_call.1} parent=1 // pred_check
      _
    $region3: #{tpu_custom_call.1} parent=1 // pred_check_branch
      %16 = sbr.rel (0) target = $region5
    $region4: #{tpu_custom_call.1} parent=1 // pred_region
      _
    $region5: #{tpu_custom_call.1} parent=1 // pred_fallthru
      _
    // Predicated region
    $region6: #{tpu_custom_call.1} parent=1 // pred_check
      _
    $region7: #{tpu_custom_call.1} parent=1 // pred_check_branch
      %18 = sbr.rel (0) target = $region9
    $region8: #{tpu_custom_call.1} parent=1 // pred_region
      _
    $region9: #{tpu_custom_call.1} parent=1 // pred_fallthru
      _
    // Predicated region
    $region10: #{tpu_custom_call.1} parent=1 // pred_check
      _
    $region11: #{tpu_custom_call.1} parent=1 // pred_check_branch
      %20 = sbr.rel (0) target = $region13
    $region12: #{tpu_custom_call.1} parent=1 // pred_region
      _
    $region13: #{tpu_custom_call.1} parent=1 // pred_fallthru
      _
    // Predicated region
    $region14: #{tpu_custom_call.1} parent=1 // pred_check
      _
    $region15: #{tpu_custom_call.1} parent=1 // pred_check_branch
      %22 = sbr.rel (0) target = $region17
    $region16: #{tpu_custom_call.1} parent=1 // pred_region
      _
    $region17: #{tpu_custom_call.1} parent=1 // pred_fallthru
      _
    // Predicated region
    $region18: #{tpu_custom_call.1} parent=1 // pred_check
      _
    $region19: #{tpu_custom_call.1} parent=1 // pred_check_branch
      %24 = sbr.rel (0) target = $region21
    $region20: #{tpu_custom_call.1} parent=1 // pred_region
      _
    $region21: #{tpu_custom_call.1} parent=1 // pred_fallthru
      _
    // Predicated region
    $region22: #{tpu_custom_call.1} parent=1 // pred_check
      _
    $region23: #{tpu_custom_call.1} parent=1 // pred_check_branch
      %26 = sbr.rel (0) target = $region25
    $region24: #{tpu_custom_call.1} parent=1 // pred_region
      _
    $region25: #{tpu_custom_call.1} parent=1 // pred_fallthru
      _
    // Predicated region
    $region26: #{tpu_custom_call.1} parent=1 // pred_check
      _
    $region27: #{tpu_custom_call.1} parent=1 // pred_check_branch
      %28 = sbr.rel (0) target = $region29
    $region28: #{tpu_custom_call.1} parent=1 // pred_region
      _
    $region29: #{tpu_custom_call.1} parent=1 // pred_fallthru
      _
    %v29 = vld [vmem:[%s0] sm:$0x1]
    %v30 = vld [vmem:[%s1] sm:$0xff]
    %v31 = vld [vmem:[%s1 + $0x8] sm:$0xff]
    %v32 = vld [vmem:[%s1 + $0x10] sm:$0xff]
    %v33 = vld [vmem:[%s1 + $0x18] sm:$0xff]
    %v34 = vld [vmem:[%s1 + $0x20] sm:$0xff]
    %v35 = vld [vmem:[%s1 + $0x28] sm:$0xff]
    %v36 = vld [vmem:[%s1 + $0x30] sm:$0xff]
    %v37 = vld [vmem:[%s1 + $0x38] sm:$0xff]
    %v38 = vld [vmem:[%s1 + $0x40] sm:$0xff]
    %v39 = vld [vmem:[%s1 + $0x48] sm:$0xff]
    %v40 = vld [vmem:[%s1 + $0x50] sm:$0xff]
    %v41 = vld [vmem:[%s1 + $0x58] sm:$0xff]
    %v42 = vld [vmem:[%s1 + $0x60] sm:$0xff]
    %v43 = vld [vmem:[%s1 + $0x68] sm:$0xff]
    %v44 = vld [vmem:[%s1 + $0x70] sm:$0xff]
    %v45 = vld [vmem:[%s1 + $0x78] sm:$0xff]
    %v46 = vld [vmem:[%s1 + $0x80] sm:$0xff]
    %v47 = vld [vmem:[%s1 + $0x88] sm:$0xff]
    %v48 = vld [vmem:[%s1 + $0x90] sm:$0xff]
    %v49 = vld [vmem:[%s1 + $0x98] sm:$0xff]
    %v50 = vld [vmem:[%s1 + $0xa0] sm:$0xff]
    %v51 = vld [vmem:[%s1 + $0xa8] sm:$0xff]
    %v52 = vld [vmem:[%s1 + $0xb0] sm:$0xff]
    %v53 = vld [vmem:[%s1 + $0xb8] sm:$0xff]
    %v54 = vld [vmem:[%s1 + $0xc0] sm:$0xff]
    %56 = vset.pattern.permute.xlu0 0
    %57 = vperm.xlu0 %56, %v30
    %v58 = vpop.permute.xlu0 %57
    %61 = vset.pattern.permute.xlu0 0
    %62 = vperm.xlu0 %61, %v31
    %v63 = vpop.permute.xlu0 %62
    %66 = vset.pattern.permute.xlu0 0
    %67 = vperm.xlu0 %66, %v32
    %v68 = vpop.permute.xlu0 %67
    %71 = vset.pattern.permute.xlu0 0
    %72 = vperm.xlu0 %71, %v33
    %v73 = vpop.permute.xlu0 %72
    %76 = vset.pattern.permute.xlu0 0
    %77 = vperm.xlu0 %76, %v34
    %v78 = vpop.permute.xlu0 %77
    %81 = vset.pattern.permute.xlu0 0
    %82 = vperm.xlu0 %81, %v35
    %v83 = vpop.permute.xlu0 %82
    %86 = vset.pattern.permute.xlu0 0
    %87 = vperm.xlu0 %86, %v36
    %v88 = vpop.permute.xlu0 %87
    %91 = vset.pattern.permute.xlu0 0
    %92 = vperm.xlu0 %91, %v37
    %v93 = vpop.permute.xlu0 %92
    %96 = vset.pattern.permute.xlu0 0
    %97 = vperm.xlu0 %96, %v38
    %v98 = vpop.permute.xlu0 %97
    %101 = vset.pattern.permute.xlu0 0
    %102 = vperm.xlu0 %101, %v39
    %v103 = vpop.permute.xlu0 %102
    %106 = vset.pattern.permute.xlu0 0
    %107 = vperm.xlu0 %106, %v40
    %v108 = vpop.permute.xlu0 %107
    %111 = vset.pattern.permute.xlu0 0
    %112 = vperm.xlu0 %111, %v41
    %v113 = vpop.permute.xlu0 %112
    %116 = vset.pattern.permute.xlu0 0
    %117 = vperm.xlu0 %116, %v42
    %v118 = vpop.permute.xlu0 %117
    %121 = vset.pattern.permute.xlu0 0
    %122 = vperm.xlu0 %121, %v43
    %v123 = vpop.permute.xlu0 %122
    %126 = vset.pattern.permute.xlu0 0
    %127 = vperm.xlu0 %126, %v44
    %v128 = vpop.permute.xlu0 %127
    %131 = vset.pattern.permute.xlu0 0
    %132 = vperm.xlu0 %131, %v45
    %v133 = vpop.permute.xlu0 %132
    %136 = vset.pattern.permute.xlu0 0
    %137 = vperm.xlu0 %136, %v46
    %v138 = vpop.permute.xlu0 %137
    %141 = vset.pattern.permute.xlu0 0
    %142 = vperm.xlu0 %141, %v47
    %v143 = vpop.permute.xlu0 %142
    %146 = vset.pattern.permute.xlu0 0
    %147 = vperm.xlu0 %146, %v48
    %v148 = vpop.permute.xlu0 %147
    %151 = vset.pattern.permute.xlu0 0
    %152 = vperm.xlu0 %151, %v49
    %v153 = vpop.permute.xlu0 %152
    %156 = vset.pattern.permute.xlu0 0
    %157 = vperm.xlu0 %156, %v50
    %v158 = vpop.permute.xlu0 %157
    %161 = vset.pattern.permute.xlu0 0
    %162 = vperm.xlu0 %161, %v51
    %v163 = vpop.permute.xlu0 %162
    %166 = vset.pattern.permute.xlu0 0
    %167 = vperm.xlu0 %166, %v52
    %v168 = vpop.permute.xlu0 %167
    %171 = vset.pattern.permute.xlu0 0
    %172 = vperm.xlu0 %171, %v53
    %v173 = vpop.permute.xlu0 %172
    %176 = vset.pattern.permute.xlu0 0
    %177 = vperm.xlu0 %176, %v54
    %v178 = vpop.permute.xlu0 %177
    %v181 = vlaneseq
    %v182 = vshrl.u32 %v181, 7
    %v183 = vsub.s32 0, %v182
    %v184 = vrot.slane %v29, %v183
    %v186 = vmul.f32 %v58, %v184
    %v187 = vmul.f32 %v63, %v184
    %v188 = vmul.f32 %v68, %v184
    %v189 = vmul.f32 %v73, %v184
    %v190 = vmul.f32 %v78, %v184
    %v191 = vmul.f32 %v83, %v184
    %v192 = vmul.f32 %v88, %v184
    %v193 = vmul.f32 %v93, %v184
    %v194 = vmul.f32 %v98, %v184
    %v195 = vmul.f32 %v103, %v184
    %v196 = vmul.f32 %v108, %v184
    %v197 = vmul.f32 %v113, %v184
    %v198 = vmul.f32 %v118, %v184
    %v199 = vmul.f32 %v123, %v184
    %v200 = vmul.f32 %v128, %v184
    %v201 = vmul.f32 %v133, %v184
    %v202 = vmul.f32 %v138, %v184
    %v203 = vmul.f32 %v143, %v184
    %v204 = vmul.f32 %v148, %v184
    %v205 = vmul.f32 %v153, %v184
    %v206 = vmul.f32 %v158, %v184
    %v207 = vmul.f32 %v163, %v184
    %v208 = vmul.f32 %v168, %v184
    %v209 = vmul.f32 %v173, %v184
    %v210 = vmul.f32 %v178, %v184
    %v211 = vld [vmem:[%s2] sm:$0xff]
    %v212 = vld [vmem:[%s2 + $0x8] sm:$0xff]
    %v213 = vld [vmem:[%s2 + $0x10] sm:$0xff]
    %v214 = vld [vmem:[%s2 + $0x18] sm:$0xff]
    %v215 = vld [vmem:[%s2 + $0x20] sm:$0xff]
    %v216 = vld [vmem:[%s2 + $0x28] sm:$0xff]
    %v217 = vld [vmem:[%s2 + $0x30] sm:$0xff]
    %v218 = vld [vmem:[%s2 + $0x38] sm:$0xff]
    %v219 = vld [vmem:[%s2 + $0x40] sm:$0xff]
    %v220 = vld [vmem:[%s2 + $0x48] sm:$0xff]
    %v221 = vld [vmem:[%s2 + $0x50] sm:$0xff]
    %v222 = vld [vmem:[%s2 + $0x58] sm:$0xff]
    %v223 = vld [vmem:[%s2 + $0x60] sm:$0xff]
    %v224 = vld [vmem:[%s2 + $0x68] sm:$0xff]
    %v225 = vld [vmem:[%s2 + $0x70] sm:$0xff]
    %v226 = vld [vmem:[%s2 + $0x78] sm:$0xff]
    %v227 = vld [vmem:[%s2 + $0x80] sm:$0xff]
    %v228 = vld [vmem:[%s2 + $0x88] sm:$0xff]
    %v229 = vld [vmem:[%s2 + $0x90] sm:$0xff]
    %v230 = vld [vmem:[%s2 + $0x98] sm:$0xff]
    %v231 = vld [vmem:[%s2 + $0xa0] sm:$0xff]
    %v232 = vld [vmem:[%s2 + $0xa8] sm:$0xff]
    %v233 = vld [vmem:[%s2 + $0xb0] sm:$0xff]
    %v234 = vld [vmem:[%s2 + $0xb8] sm:$0xff]
    %v235 = vld [vmem:[%s2 + $0xc0] sm:$0xff]
    %237 = vset.pattern.permute.xlu0 0
    %238 = vperm.xlu0 %237, %v211
    %v239 = vpop.permute.xlu0 %238
    %242 = vset.pattern.permute.xlu0 0
    %243 = vperm.xlu0 %242, %v212
    %v244 = vpop.permute.xlu0 %243
    %247 = vset.pattern.permute.xlu0 0
    %248 = vperm.xlu0 %247, %v213
    %v249 = vpop.permute.xlu0 %248
    %252 = vset.pattern.permute.xlu0 0
    %253 = vperm.xlu0 %252, %v214
    %v254 = vpop.permute.xlu0 %253
    %257 = vset.pattern.permute.xlu0 0
    %258 = vperm.xlu0 %257, %v215
    %v259 = vpop.permute.xlu0 %258
    %262 = vset.pattern.permute.xlu0 0
    %263 = vperm.xlu0 %262, %v216
    %v264 = vpop.permute.xlu0 %263
    %267 = vset.pattern.permute.xlu0 0
    %268 = vperm.xlu0 %267, %v217
    %v269 = vpop.permute.xlu0 %268
    %272 = vset.pattern.permute.xlu0 0
    %273 = vperm.xlu0 %272, %v218
    %v274 = vpop.permute.xlu0 %273
    %277 = vset.pattern.permute.xlu0 0
    %278 = vperm.xlu0 %277, %v219
    %v279 = vpop.permute.xlu0 %278
    %282 = vset.pattern.permute.xlu0 0
    %283 = vperm.xlu0 %282, %v220
    %v284 = vpop.permute.xlu0 %283
    %287 = vset.pattern.permute.xlu0 0
    %288 = vperm.xlu0 %287, %v221
    %v289 = vpop.permute.xlu0 %288
    %292 = vset.pattern.permute.xlu0 0
    %293 = vperm.xlu0 %292, %v222
    %v294 = vpop.permute.xlu0 %293
    %297 = vset.pattern.permute.xlu0 0
    %298 = vperm.xlu0 %297, %v223
    %v299 = vpop.permute.xlu0 %298
    %302 = vset.pattern.permute.xlu0 0
    %303 = vperm.xlu0 %302, %v224
    %v304 = vpop.permute.xlu0 %303
    %307 = vset.pattern.permute.xlu0 0
    %308 = vperm.xlu0 %307, %v225
    %v309 = vpop.permute.xlu0 %308
    %312 = vset.pattern.permute.xlu0 0
    %313 = vperm.xlu0 %312, %v226
    %v314 = vpop.permute.xlu0 %313
    %317 = vset.pattern.permute.xlu0 0
    %318 = vperm.xlu0 %317, %v227
    %v319 = vpop.permute.xlu0 %318
    %322 = vset.pattern.permute.xlu0 0
    %323 = vperm.xlu0 %322, %v228
    %v324 = vpop.permute.xlu0 %323
    %327 = vset.pattern.permute.xlu0 0
    %328 = vperm.xlu0 %327, %v229
    %v329 = vpop.permute.xlu0 %328
    %332 = vset.pattern.permute.xlu0 0
    %333 = vperm.xlu0 %332, %v230
    %v334 = vpop.permute.xlu0 %333
    %337 = vset.pattern.permute.xlu0 0
    %338 = vperm.xlu0 %337, %v231
    %v339 = vpop.permute.xlu0 %338
    %342 = vset.pattern.permute.xlu0 0
    %343 = vperm.xlu0 %342, %v232
    %v344 = vpop.permute.xlu0 %343
    %347 = vset.pattern.permute.xlu0 0
    %348 = vperm.xlu0 %347, %v233
    %v349 = vpop.permute.xlu0 %348
    %352 = vset.pattern.permute.xlu0 0
    %353 = vperm.xlu0 %352, %v234
    %v354 = vpop.permute.xlu0 %353
    %357 = vset.pattern.permute.xlu0 0
    %358 = vperm.xlu0 %357, %v235
    %v359 = vpop.permute.xlu0 %358
    %v361 = vadd.f32 %v186, %v239
    %v362 = vadd.f32 %v187, %v244
    %v363 = vadd.f32 %v188, %v249
    %v364 = vadd.f32 %v189, %v254
    %v365 = vadd.f32 %v190, %v259
    %v366 = vadd.f32 %v191, %v264
    %v367 = vadd.f32 %v192, %v269
    %v368 = vadd.f32 %v193, %v274
    %v369 = vadd.f32 %v194, %v279
    %v370 = vadd.f32 %v195, %v284
    %v371 = vadd.f32 %v196, %v289
    %v372 = vadd.f32 %v197, %v294
    %v373 = vadd.f32 %v198, %v299
    %v374 = vadd.f32 %v199, %v304
    %v375 = vadd.f32 %v200, %v309
    %v376 = vadd.f32 %v201, %v314
    %v377 = vadd.f32 %v202, %v319
    %v378 = vadd.f32 %v203, %v324
    %v379 = vadd.f32 %v204, %v329
    %v380 = vadd.f32 %v205, %v334
    %v381 = vadd.f32 %v206, %v339
    %v382 = vadd.f32 %v207, %v344
    %v383 = vadd.f32 %v208, %v349
    %v384 = vadd.f32 %v209, %v354
    %v385 = vadd.f32 %v210, %v359
    %v386 = vmax.f32 %v361, 0.0
    %v387 = vmax.f32 %v362, 0.0
    %v388 = vmax.f32 %v363, 0.0
    %v389 = vmax.f32 %v364, 0.0
    %v390 = vmax.f32 %v365, 0.0
    %v391 = vmax.f32 %v366, 0.0
    %v392 = vmax.f32 %v367, 0.0
    %v393 = vmax.f32 %v368, 0.0
    %v394 = vmax.f32 %v369, 0.0
    %v395 = vmax.f32 %v370, 0.0
    %v396 = vmax.f32 %v371, 0.0
    %v397 = vmax.f32 %v372, 0.0
    %v398 = vmax.f32 %v373, 0.0
    %v399 = vmax.f32 %v374, 0.0
    %v400 = vmax.f32 %v375, 0.0
    %v401 = vmax.f32 %v376, 0.0
    %v402 = vmax.f32 %v377, 0.0
    %v403 = vmax.f32 %v378, 0.0
    %v404 = vmax.f32 %v379, 0.0
    %v405 = vmax.f32 %v380, 0.0
    %v406 = vmax.f32 %v381, 0.0
    %v407 = vmax.f32 %v382, 0.0
    %v408 = vmax.f32 %v383, 0.0
    %v409 = vmax.f32 %v384, 0.0
    %v410 = vmax.f32 %v385, 0.0
    %v411 = vld [vmem:[%s3] sm:$0xff]
    %v412 = vld [vmem:[%s3 + $0x8] sm:$0xff]
    %v413 = vld [vmem:[%s3 + $0x10] sm:$0x3]
    %v414 = vld [vmem:[%s3 + $0x18] sm:$0x3]
    %v415 = vld [vmem:[%s4] sm:$0xff]
    %v416 = vld [vmem:[%s4 + $0x8] sm:$0x3]
    %418 = vset.pattern.permute.xlu0 0
    %419 = vperm.xlu0 %418, %v415
    %v420 = vpop.permute.xlu0 %419
    %423 = vset.pattern.permute.xlu0 0
    %424 = vperm.xlu0 %423, %v416
    %v425 = vpop.permute.xlu0 %424
    %vm427 = vcmask 588800
    %v429 = vsel %vm427, %v412, 0
    %v432 = vsel %vm427, %v414, 0
    %434 = vmatprep.subr.mxu0 0.0
    %435 = vmatpush1.msra.mxu0 %v401
    %436 = vmatprep.subr.mxu0 0.0
    %437 = vmatpush1.msra.mxu0 %v400
    %438 = vmatprep.subr.mxu0 0.0
    %439 = vmatpush1.msra.mxu0 %v399
    %440 = vmatprep.subr.mxu0 0.0
    %441 = vmatpush1.msra.mxu0 %v398
    %442 = vmatprep.subr.mxu0 0.0
    %443 = vmatpush1.msra.mxu0 %v397
    %444 = vmatprep.subr.mxu0 0.0
    %445 = vmatpush1.msra.mxu0 %v396
    %446 = vmatprep.subr.mxu0 0.0
    %447 = vmatpush1.msra.mxu0 %v395
    %448 = vmatprep.subr.mxu0 0.0
    %449 = vmatpush1.msra.mxu0 %v394
    %450 = vmatprep.subr.mxu0 0.0
    %451 = vmatpush1.msra.mxu0 %v393
    %452 = vmatprep.subr.mxu0 0.0
    %453 = vmatpush1.msra.mxu0 %v392
    %454 = vmatprep.subr.mxu0 0.0
    %455 = vmatpush1.msra.mxu0 %v391
    %456 = vmatprep.subr.mxu0 0.0
    %457 = vmatpush1.msra.mxu0 %v390
    %458 = vmatprep.subr.mxu0 0.0
    %459 = vmatpush1.msra.mxu0 %v389
    %460 = vmatprep.subr.mxu0 0.0
    %461 = vmatpush1.msra.mxu0 %v388
    %462 = vmatprep.subr.mxu0 0.0
    %463 = vmatpush1.msra.mxu0 %v387
    %464 = vmatprep.subr.mxu0 0.0
    %465 = vmatpush1.msra.mxu0 %v386
    %466 = vmatprep.subr.mxu0 0.0
    %467 = vmatpush2.msra.mxu0 0.0
    %468 = vmatprep.subr.mxu0 0.0
    %469 = vmatpush2.msra.mxu0 0.0
    %470 = vmatprep.subr.mxu0 0.0
    %471 = vmatpush2.msra.mxu0 0.0
    %472 = vmatprep.subr.mxu0 0.0
    %473 = vmatpush2.msra.mxu0 0.0
    %474 = vmatprep.subr.mxu0 0.0
    %475 = vmatpush2.msra.mxu0 0.0
    %476 = vmatprep.subr.mxu0 0.0
    %477 = vmatpush2.msra.mxu0 0.0
    %478 = vmatprep.subr.mxu0 0.0
    %479 = vmatpush2.msra.mxu0 0.0
    %480 = vmatprep.subr.mxu0 0.0
    %481 = vmatpush2.msra.mxu0 %v410
    %482 = vmatprep.subr.mxu0 0.0
    %483 = vmatpush2.msra.mxu0 %v409
    %484 = vmatprep.subr.mxu0 0.0
    %485 = vmatpush2.msra.mxu0 %v408
    %486 = vmatprep.subr.mxu0 0.0
    %487 = vmatpush2.msra.mxu0 %v407
    %488 = vmatprep.subr.mxu0 0.0
    %489 = vmatpush2.msra.mxu0 %v406
    %490 = vmatprep.subr.mxu0 0.0
    %491 = vmatpush2.msra.mxu0 %v405
    %492 = vmatprep.subr.mxu0 0.0
    %493 = vmatpush2.msra.mxu0 %v404
    %494 = vmatprep.subr.mxu0 0.0
    %495 = vmatpush2.msra.mxu0 %v403
    %496 = vmatprep.subr.mxu0 0.0
    %497 = vmatpush2.msra.mxu0 %v402
    %498 = vmatprep.mubr.f32.mxu0 %v429
    %499 = vmatmul.mubr.f32.gmra.mxu0 %v411
    %v500 = vpop.f32.mrf.mxu0
    %v501 = vadd.f32 %v420, %v500
    %v502 = vpop.f32.mrf.mxu0
    %503 = vmatprep.mubr.f32.mxu0 %v432
    %504 = vmatmul.mubr.f32.gmra.mxu0 %v413
    %v505 = vpop.f32.mrf.mxu0
    %v506 = vadd.f32 %v425, %v505
    %v507 = vpop.f32.mrf.mxu0
    %508 = vdwg.mxu0
    %v509 = vmax.f32 %v501, 0.0
    %v510 = vmax.f32 %v506, 0.0
    %v511 = vld [vmem:[%s5] sm:$0xff]
    %v512 = vld [vmem:[%s5 + $0x8] sm:$0x3]
    %514 = vset.pattern.permute.xlu0 0
    %515 = vperm.xlu0 %514, %v511
    %v516 = vpop.permute.xlu0 %515
    %519 = vset.pattern.permute.xlu0 0
    %520 = vperm.xlu0 %519, %v512
    %v521 = vpop.permute.xlu0 %520
    %v523 = vmul.f32 %v509, %v516
    %v524 = vmul.f32 %v510, %v521
    %vm525 = vcmask 1041408
    %v526 = vsel %vm525, %v524, 0.0
    %v527 = vadd.f32 %v523, %v526
    %v528 = vrot.slane %v527, 4
    %v529 = vadd.f32 %v527, %v528
    %v530 = vrot.slane %v529, 2
    %v531 = vadd.f32 %v529, %v530
    %v532 = vrot.slane %v531, 1
    %v533 = vadd.f32 %v531, %v532
    %v534 = vld [vmem:[#allocation2] sm:$0x1]
    %536 = vset.pattern.permute.xlu0 0
    %537 = vperm.xlu0 %536, %v534
    %v538 = vpop.permute.xlu0 %537
    %v540 = vlaneseq
    %v541 = vshrl.u32 %v540, 7
    %v542 = vsub.s32 0, %v541
    %v543 = vrot.slane %v538, %v542
    %v544 = vadd.f32 %v533, %v543
    %545 = vst [vmem:[#allocation3] sm:$0x1] %v544
    // Predicated region
    $region30: #{tpu_custom_call.1} parent=1 // pred_check
      _
    $region31: #{tpu_custom_call.1} parent=1 // pred_check_branch
      %547 = sbr.rel (0) target = $region33
    $region32: #{tpu_custom_call.1} parent=1 // pred_region
      %s549 = ssub.s32 16, 16
      %550 = vsyncadd [#allocation4], %s549
      %s552 = sshll.u32 [#allocation3], 4
      %s553 = int_to_ptr.vmem [resolvable:$true] %s552
      %555 = dma.vmem_to_hbm [thread:$0]  %s553, 16, %s7, [#allocation4]
    $region33: #{tpu_custom_call.1} parent=1 // pred_fallthru
      _
    // Predicated region
    $region34: #{tpu_custom_call.1} parent=1 // pred_check
      _
    $region35: #{tpu_custom_call.1} parent=1 // pred_check_branch
      %557 = sbr.rel (0) target = $region37
    $region36: #{tpu_custom_call.1} parent=1 // pred_region
      %558 = dma.done [#allocation4], 16
    $region37: #{tpu_custom_call.1} parent=1 // pred_fallthru
      _
    %559 = vsyncpa [#allocation4], 1

</llo_original>
